<compile_context>
chip_gen: v5e
topology: v5e:2x2
jax: 0.10.0
libtpu: 0.0.40
codegen_flags: <defaults>
</compile_context>

<pallas_src>
import functools

import jax
import jax.numpy as jnp
from jax.experimental import pallas as pl
from jax.experimental.pallas import tpu as pltpu

EPS = 1e-09


def _dice_ce_kernel(x_ref, t_ref, o_ref, inter_acc, den_acc, ce_acc, *, onehot):
    # x_ref, t_ref: (1, C, TS) blocks.  o_ref: (1, 1, 8, 128) per-(b, s_outer)
    # output slab.  *_acc: (1, TS) VMEM per-lane accumulators.
    k = pl.program_id(2)

    @pl.when(k == 0)
    def _():
        inter_acc[...] = jnp.zeros_like(inter_acc)
        den_acc[...] = jnp.zeros_like(den_acc)
        ce_acc[...] = jnp.zeros_like(ce_acc)

    x = x_ref[0].astype(jnp.float32)   # (C, TS) logits
    t = t_ref[0].astype(jnp.float32)   # (C, TS) target (one-hot or soft)
    C = x.shape[0]

    # --- softmax statistics over the channel (sublane) axis.  The probs
    # p = e / ssum are never materialized: dice sums are rescaled with one
    # (1, TS) reciprocal instead of a full (C, TS) divide.
    m = jnp.max(x, axis=0, keepdims=True)            # (1, TS)
    # TODO(synk): bf16 exp on the dice path could halve EUP pushes on v6e/v7x;
    # kept f32 so both dice and the CE log-sum-exp hold the 1e-5 tolerance.
    e = jnp.exp(x - m)                               # (C, TS)
    ssum = jnp.sum(e, axis=0, keepdims=True)         # (1, TS)
    # Exact (1, TS) divide: 1/C the cost of the old (C, TS) divide, and unlike
    # the approximate EUP reciprocal it keeps dice within 1e-5 of reference.
    inv = 1.0 / ssum                                 # (1, TS)
    lse = m + jnp.log(ssum)                          # (1, TS) exact LSE for CE

    # --- dice partial sums, kept per-lane (cheap VPU adds) ---
    inter_acc[...] += inv * jnp.sum(e * t, axis=0, keepdims=True)          # sum(p*t)
    den_acc[...] += (inv * inv) * jnp.sum(e * e, axis=0, keepdims=True)    # sum(p^2)

    if onehot:
        # One-hot contract: the CE gather is a masked sum, and sum(t^2) == 1
        # per position, added as the constant S in the wrapper (no reduce).
        x_sel = jnp.sum(x * t, axis=0, keepdims=True)                      # (1, TS)
    else:
        # General path matching torch.argmax(target, dim=1) semantics (first
        # maximal channel on ties) for soft / non-one-hot targets.
        den_acc[...] += jnp.sum(t * t, axis=0, keepdims=True)              # sum(t^2)
        ch = jax.lax.broadcasted_iota(jnp.int32, t.shape, 0)               # (C, TS)
        tmax = jnp.max(t, axis=0, keepdims=True)                           # (1, TS)
        idx = jnp.min(jnp.where(t == tmax, ch, C), axis=0, keepdims=True)  # (1, TS)
        x_sel = jnp.sum(jnp.where(ch == idx, x, 0.0), axis=0, keepdims=True)

    ce_acc[...] += lse - x_sel                       # per-position -log p[target]

    # --- finalize once per (b, s_outer): lane reduce + pack three scalars ---
    @pl.when(k == pl.num_programs(2) - 1)
    def _():
        inter = jnp.sum(inter_acc[...])
        den = jnp.sum(den_acc[...])
        ce = jnp.sum(ce_acc[...])
        si = jax.lax.broadcasted_iota(jnp.int32, (8, 128), 0)
        li = jax.lax.broadcasted_iota(jnp.int32, (8, 128), 1)
        o_ref[0, 0] = (jnp.where((si == 0) & (li == 0), inter, 0.0)
                       + jnp.where((si == 0) & (li == 1), den, 0.0)
                       + jnp.where((si == 0) & (li == 2), ce, 0.0))


def _round_up(v, m):
    return ((v + m - 1) // m) * m


def _sublane_multiple(itemsize):
    if itemsize >= 4:
        return 8
    if itemsize == 2:
        return 16
    return 32


def _pick_tile_s(S, per_lane_bytes, budget_bytes=12 << 20, max_lanes=16384,
                 prefer_even_count=False):
    """Largest 128-multiple divisor of S whose VMEM footprint fits the budget.

    When `prefer_even_count` (B == 1), prefer a tile whose tile count is even
    so the spatial axis can be split 2-way across v7x TensorCores.
    """
    cap = min(S, max_lanes, max(128, budget_bytes // max(1, per_lane_bytes)))
    cap = max(128, (cap // 128) * 128)
    best, best_even = 128, None
    t = 128
    while t <= cap:
        if S % t == 0:
            best = t
            if (S // t) % 2 == 0:
                best_even = t
        t += 128
    if prefer_even_count and best_even is not None and best_even * 2 >= best:
        return best_even
    return best


@functools.partial(jax.jit, static_argnames=("assume_onehot_target",))
def dice_ce_loss_2(x, target, assume_onehot_target=True):
    """x, target: (B, C, H, W, D).  Returns scalar dice + CE total loss.

    assume_onehot_target=True enables the fast CE/dice path (exact when the
    target is one-hot over the channel axis, the standard segmentation case).
    Pass False for soft / non-one-hot targets to keep the module's exact
    torch.argmax(target, dim=1) semantics.
    """
    B, C = x.shape[0], x.shape[1]
    S = x.shape[2] * x.shape[3] * x.shape[4]
    # TODO(synk): ragged S (not a multiple of 128) would need a masked last
    # tile (lane iota vs. a valid count) instead of this assert.
    assert S % 128 == 0, "flattened spatial size must be a multiple of 128"

    x_item = jnp.dtype(x.dtype).itemsize
    t_item = jnp.dtype(target.dtype).itemsize
    c_pad_x = _round_up(C, _sublane_multiple(x_item))
    c_pad_t = _round_up(C, _sublane_multiple(t_item))
    # VMEM bytes per lane of the spatial tile: double-buffered x and target
    # blocks + three (1, tile_s) f32 accumulators (padded to 8 sublanes).
    per_lane_bytes = 2 * c_pad_x * x_item + 2 * c_pad_t * t_item + 3 * 8 * 4

    tile_s = _pick_tile_s(S, per_lane_bytes, prefer_even_count=(B == 1))
    n_tiles = S // tile_s
    # Small parallel outer split of the spatial tiles so both v7x TensorCores
    # have work even when B == 1 (neutral on single-TC v5e/v6e).
    n_outer = 2 if (n_tiles % 2 == 0) else 1
    n_inner = n_tiles // n_outer

    x3 = x.reshape(B, C, S)
    # Target stays in its native (possibly narrower) dtype: the kernel casts
    # per block, avoiding a wrapper-side HBM pass and cutting target read
    # traffic 2-4x for bf16 / int8 one-hot targets.
    t3 = target.reshape(B, C, S)
    # TODO(synk): shipping (B, S) int class indices instead of the one-hot
    # tensor would cut target HBM traffic ~C-fold (biggest lever on v5e).

    def in_index_map(b, o, k):
        return (b, 0, o * n_inner + k)

    def out_index_map(b, o, k):
        return (b, o, 0, 0)

    vmem_needed = per_lane_bytes * tile_s + 2 * 8 * 128 * 4
    compiler_kwargs = dict(
        dimension_semantics=("parallel", "parallel", "arbitrary"))
    if vmem_needed > (12 << 20):           # only kicks in for very large C
        try:
            phys_vmem = pltpu.get_tpu_info().vmem_capacity_bytes
        except Exception:
            phys_vmem = 64 << 20           # conservative: v7x per-core VMEM
        compiler_kwargs["vmem_limit_bytes"] = int(
            min(vmem_needed * 3 // 2 + (4 << 20), phys_vmem * 3 // 4))

    kernel = functools.partial(_dice_ce_kernel, onehot=assume_onehot_target)
    partials = pl.pallas_call(
        kernel,
        out_shape=jax.ShapeDtypeStruct((B, n_outer, 8, 128), jnp.float32),
        grid_spec=pltpu.PrefetchScalarGridSpec(
            num_scalar_prefetch=0,
            grid=(B, n_outer, n_inner),
            in_specs=[
                pl.BlockSpec((1, C, tile_s), in_index_map),
                pl.BlockSpec((1, C, tile_s), in_index_map),
            ],
            out_specs=pl.BlockSpec((1, 1, 8, 128), out_index_map),
            scratch_shapes=[pltpu.VMEM((1, tile_s), jnp.float32),
                            pltpu.VMEM((1, tile_s), jnp.float32),
                            pltpu.VMEM((1, tile_s), jnp.float32)],
        ),
        compiler_params=pltpu.CompilerParams(**compiler_kwargs),
    )(x3, t3)

    inter = jnp.sum(partials[:, :, 0, 0], axis=1)    # (B,)  sum(p*t)
    den = jnp.sum(partials[:, :, 0, 1], axis=1)      # (B,)  sum(p^2) [+ sum(t^2)]
    ce_sum = jnp.sum(partials[:, :, 0, 2], axis=1)   # (B,)  sum of -log p[target]
    if assume_onehot_target:
        den = den + jnp.float32(S)                   # one-hot: sum(t^2) == S

    dc = 2.0 * inter / (den + EPS)
    dice_loss = jnp.mean(1.0 - dc)                   # mean over batch
    ce_loss = jnp.sum(ce_sum) / (B * S)              # mean over B*H*W*D
    return dice_loss + ce_loss


def _reference(x, target):
    """Pure-JAX reference matching the PyTorch module semantics."""
    p = jax.nn.softmax(x, axis=1)
    num = 2.0 * jnp.sum(p * target, axis=(1, 2, 3, 4))
    den = jnp.sum(p * p + target * target, axis=(1, 2, 3, 4)) + EPS
    dice_loss = jnp.mean(1.0 - num / den)
    tgt_idx = jnp.argmax(target, axis=1)                      # (B, H, W, D)
    logp = jax.nn.log_softmax(x, axis=1)
    gathered = jnp.take_along_axis(logp, tgt_idx[:, None], axis=1)[:, 0]
    ce_loss = -jnp.mean(gathered)
    return dice_loss + ce_loss


if __name__ == "__main__":
    key = jax.random.PRNGKey(0)
    kx, kt = jax.random.split(key)

    B, C, H, W, D = 2, 4, 8, 8, 8
    x = jax.random.normal(kx, (B, C, H, W, D), dtype=jnp.float32)
    # target as one-hot over the channel dim (same #channels as input, so the
    # module takes the argmax branch); shipped in bf16 (exact for 0/1 values)
    # to halve target HBM traffic.
    cls = jax.random.randint(kt, (B, H, W, D), 0, C)
    target = jax.nn.one_hot(cls, C, axis=1, dtype=jnp.bfloat16)  # (B, C, H, W, D)

    ref = _reference(x, target.astype(jnp.float32))

    # Fast one-hot path (default).
    out = dice_ce_loss_2(x, target)
    out = jax.block_until_ready(out)
    assert jnp.allclose(out, ref, atol=1e-5, rtol=1e-5), (out, ref)

    # General soft-target / argmax path.
    out2 = dice_ce_loss_2(x, target.astype(jnp.float32),
                          assume_onehot_target=False)
    out2 = jax.block_until_ready(out2)
    assert jnp.allclose(out2, ref, atol=1e-5, rtol=1e-5), (out2, ref)

    print("KERNEL_OK")
</pallas_src>

<mosaic_0001>
module attributes {stable_mosaic.version = 11 : i64} {
  func.func @_dice_ce_kernel(%arg0: i32, %arg1: i32, %arg2: i32, %arg3: memref<1x4x512xf32, #tpu.memory_space<vmem>>, %arg4: memref<1x4x512xbf16, #tpu.memory_space<vmem>>, %arg5: memref<1x1x8x128xf32, #tpu.memory_space<vmem>>, %arg6: memref<1x512xf32, #tpu.memory_space<vmem>>, %arg7: memref<1x512xf32, #tpu.memory_space<vmem>>, %arg8: memref<1x512xf32, #tpu.memory_space<vmem>>) attributes {dimension_semantics = [#tpu.dimension_semantics<parallel>, #tpu.dimension_semantics<parallel>, #tpu.dimension_semantics<arbitrary>], iteration_bounds = array<i64: 2, 1, 1>, scalar_prefetch = 0 : i64, scratch_operands = 3 : i64, tpu.core_type = #tpu.core_type<tc>, window_params = [{transform_indices = @transform_0, window_bounds = array<i64: 1, 4, 512>}, {transform_indices = @transform_1, window_bounds = array<i64: 1, 4, 512>}, {transform_indices = @transform_2, window_bounds = array<i64: 1, 1, 8, 128>}]} {
    %c0_i32 = arith.constant 0 : i32
    %0 = arith.cmpi eq, %arg2, %c0_i32 : i32
    %1 = arith.extui %0 : i1 to i32
    %c0_i32_0 = arith.constant 0 : i32
    %2 = arith.cmpi ne, %1, %c0_i32_0 : i32
    scf.if %2 {
      %cst_25 = arith.constant 0.000000e+00 : f32
      %44 = vector.broadcast %cst_25 : f32 to vector<1x512xf32>
      %c0_26 = arith.constant 0 : index
      %c0_27 = arith.constant 0 : index
      %45 = vector.load %arg6[%c0_26, %c0_27] : memref<1x512xf32, #tpu.memory_space<vmem>>, vector<1x512xf32>
      tpu.vector_store %arg6[%c0_26, %c0_27], %44 {strides = array<i32>} : memref<1x512xf32, #tpu.memory_space<vmem>>, vector<1x512xf32>,
      %cst_28 = arith.constant 0.000000e+00 : f32
      %46 = vector.broadcast %cst_28 : f32 to vector<1x512xf32>
      %c0_29 = arith.constant 0 : index
      %c0_30 = arith.constant 0 : index
      %47 = vector.load %arg7[%c0_29, %c0_30] : memref<1x512xf32, #tpu.memory_space<vmem>>, vector<1x512xf32>
      tpu.vector_store %arg7[%c0_29, %c0_30], %46 {strides = array<i32>} : memref<1x512xf32, #tpu.memory_space<vmem>>, vector<1x512xf32>,
      %cst_31 = arith.constant 0.000000e+00 : f32
      %48 = vector.broadcast %cst_31 : f32 to vector<1x512xf32>
      %c0_32 = arith.constant 0 : index
      %c0_33 = arith.constant 0 : index
      %49 = vector.load %arg8[%c0_32, %c0_33] : memref<1x512xf32, #tpu.memory_space<vmem>>, vector<1x512xf32>
      tpu.vector_store %arg8[%c0_32, %c0_33], %48 {strides = array<i32>} : memref<1x512xf32, #tpu.memory_space<vmem>>, vector<1x512xf32>,
    } else {
    }
    %c0 = arith.constant 0 : index
    %c0_1 = arith.constant 0 : index
    %c0_2 = arith.constant 0 : index
    %3 = vector.load %arg3[%c0, %c0_1, %c0_2] : memref<1x4x512xf32, #tpu.memory_space<vmem>>, vector<1x4x512xf32>
    %4 = vector.shape_cast %3 : vector<1x4x512xf32> to vector<4x512xf32>
    %c0_3 = arith.constant 0 : index
    %c0_4 = arith.constant 0 : index
    %c0_5 = arith.constant 0 : index
    %5 = vector.load %arg4[%c0_3, %c0_4, %c0_5] : memref<1x4x512xbf16, #tpu.memory_space<vmem>>, vector<1x4x512xbf16>
    %6 = vector.shape_cast %5 : vector<1x4x512xbf16> to vector<4x512xbf16>
    %7 = arith.extf %6 : vector<4x512xbf16> to vector<4x512xf32>
    %cst = arith.constant dense<0xFF800000> : vector<512xf32>
    %8 = vector.multi_reduction <maximumf>, %4, %cst [0] : vector<4x512xf32> to vector<512xf32>
    %9 = vector.shape_cast %8 : vector<512xf32> to vector<1x512xf32>
    %10 = vector.broadcast %9 : vector<1x512xf32> to vector<4x512xf32>
    %11 = arith.subf %4, %10 : vector<4x512xf32>
    %12 = math.exp %11 : vector<4x512xf32>
    %cst_6 = arith.constant dense<0.000000e+00> : vector<512xf32>
    %13 = vector.multi_reduction <add>, %12, %cst_6 [0] : vector<4x512xf32> to vector<512xf32>
    %14 = vector.shape_cast %13 : vector<512xf32> to vector<1x512xf32>
    %cst_7 = arith.constant 1.000000e+00 : f32
    %15 = vector.broadcast %cst_7 : f32 to vector<1x512xf32>
    %16 = arith.divf %15, %14 : vector<1x512xf32>
    %17 = math.log %14 : vector<1x512xf32>
    %18 = arith.addf %9, %17 : vector<1x512xf32>
    %c0_8 = arith.constant 0 : index
    %c0_9 = arith.constant 0 : index
    %19 = vector.load %arg6[%c0_8, %c0_9] : memref<1x512xf32, #tpu.memory_space<vmem>>, vector<1x512xf32>
    %20 = arith.mulf %12, %7 : vector<4x512xf32>
    %cst_10 = arith.constant dense<0.000000e+00> : vector<512xf32>
    %21 = vector.multi_reduction <add>, %20, %cst_10 [0] : vector<4x512xf32> to vector<512xf32>
    %22 = vector.shape_cast %21 : vector<512xf32> to vector<1x512xf32>
    %23 = arith.mulf %16, %22 : vector<1x512xf32>
    %24 = arith.addf %19, %23 : vector<1x512xf32>
    %c0_11 = arith.constant 0 : index
    %c0_12 = arith.constant 0 : index
    %25 = vector.load %arg6[%c0_11, %c0_12] : memref<1x512xf32, #tpu.memory_space<vmem>>, vector<1x512xf32>
    tpu.vector_store %arg6[%c0_11, %c0_12], %24 {strides = array<i32>} : memref<1x512xf32, #tpu.memory_space<vmem>>, vector<1x512xf32>,
    %c0_13 = arith.constant 0 : index
    %c0_14 = arith.constant 0 : index
    %26 = vector.load %arg7[%c0_13, %c0_14] : memref<1x512xf32, #tpu.memory_space<vmem>>, vector<1x512xf32>
    %27 = arith.mulf %16, %16 : vector<1x512xf32>
    %28 = arith.mulf %12, %12 : vector<4x512xf32>
    %cst_15 = arith.constant dense<0.000000e+00> : vector<512xf32>
    %29 = vector.multi_reduction <add>, %28, %cst_15 [0] : vector<4x512xf32> to vector<512xf32>
    %30 = vector.shape_cast %29 : vector<512xf32> to vector<1x512xf32>
    %31 = arith.mulf %27, %30 : vector<1x512xf32>
    %32 = arith.addf %26, %31 : vector<1x512xf32>
    %c0_16 = arith.constant 0 : index
    %c0_17 = arith.constant 0 : index
    %33 = vector.load %arg7[%c0_16, %c0_17] : memref<1x512xf32, #tpu.memory_space<vmem>>, vector<1x512xf32>
    tpu.vector_store %arg7[%c0_16, %c0_17], %32 {strides = array<i32>} : memref<1x512xf32, #tpu.memory_space<vmem>>, vector<1x512xf32>,
    %34 = arith.mulf %4, %7 : vector<4x512xf32>
    %cst_18 = arith.constant dense<0.000000e+00> : vector<512xf32>
    %35 = vector.multi_reduction <add>, %34, %cst_18 [0] : vector<4x512xf32> to vector<512xf32>
    %36 = vector.shape_cast %35 : vector<512xf32> to vector<1x512xf32>
    %c0_19 = arith.constant 0 : index
    %c0_20 = arith.constant 0 : index
    %37 = vector.load %arg8[%c0_19, %c0_20] : memref<1x512xf32, #tpu.memory_space<vmem>>, vector<1x512xf32>
    %38 = arith.subf %18, %36 : vector<1x512xf32>
    %39 = arith.addf %37, %38 : vector<1x512xf32>
    %c0_21 = arith.constant 0 : index
    %c0_22 = arith.constant 0 : index
    %40 = vector.load %arg8[%c0_21, %c0_22] : memref<1x512xf32, #tpu.memory_space<vmem>>, vector<1x512xf32>
    tpu.vector_store %arg8[%c0_21, %c0_22], %39 {strides = array<i32>} : memref<1x512xf32, #tpu.memory_space<vmem>>, vector<1x512xf32>,
    %c0_i32_23 = arith.constant 0 : i32
    %41 = arith.cmpi eq, %arg2, %c0_i32_23 : i32
    %42 = arith.extui %41 : i1 to i32
    %c0_i32_24 = arith.constant 0 : i32
    %43 = arith.cmpi ne, %42, %c0_i32_24 : i32
    scf.if %43 {
      %c0_25 = arith.constant 0 : index
      %c0_26 = arith.constant 0 : index
      %44 = vector.load %arg6[%c0_25, %c0_26] : memref<1x512xf32, #tpu.memory_space<vmem>>, vector<1x512xf32>
      %45 = vector.shape_cast %44 : vector<1x512xf32> to vector<1x1x512xf32>
      %cst_27 = arith.constant dense<0.000000e+00> : vector<1xf32>
      %46 = vector.multi_reduction <add>, %45, %cst_27 [1, 2] : vector<1x1x512xf32> to vector<1xf32>
      %47 = vector.shape_cast %46 : vector<1xf32> to vector<1x1x1xf32>
      %48 = vector.extract %47[0, 0, 0] : f32 from vector<1x1x1xf32>
      %c0_28 = arith.constant 0 : index
      %c0_29 = arith.constant 0 : index
      %49 = vector.load %arg7[%c0_28, %c0_29] : memref<1x512xf32, #tpu.memory_space<vmem>>, vector<1x512xf32>
      %50 = vector.shape_cast %49 : vector<1x512xf32> to vector<1x1x512xf32>
      %cst_30 = arith.constant dense<0.000000e+00> : vector<1xf32>
      %51 = vector.multi_reduction <add>, %50, %cst_30 [1, 2] : vector<1x1x512xf32> to vector<1xf32>
      %52 = vector.shape_cast %51 : vector<1xf32> to vector<1x1x1xf32>
      %53 = vector.extract %52[0, 0, 0] : f32 from vector<1x1x1xf32>
      %c0_31 = arith.constant 0 : index
      %c0_32 = arith.constant 0 : index
      %54 = vector.load %arg8[%c0_31, %c0_32] : memref<1x512xf32, #tpu.memory_space<vmem>>, vector<1x512xf32>
      %55 = vector.shape_cast %54 : vector<1x512xf32> to vector<1x1x512xf32>
      %cst_33 = arith.constant dense<0.000000e+00> : vector<1xf32>
      %56 = vector.multi_reduction <add>, %55, %cst_33 [1, 2] : vector<1x1x512xf32> to vector<1xf32>
      %57 = vector.shape_cast %56 : vector<1xf32> to vector<1x1x1xf32>
      %58 = vector.extract %57[0, 0, 0] : f32 from vector<1x1x1xf32>
      %59 = tpu.iota {dimensions = array<i32: 0>} : vector<8x128xi32>
      %60 = tpu.iota {dimensions = array<i32: 1>} : vector<8x128xi32>
      %c0_i32_34 = arith.constant 0 : i32
      %61 = vector.broadcast %c0_i32_34 : i32 to vector<8x128xi32>
      %62 = arith.cmpi eq, %59, %61 : vector<8x128xi32>
      %c0_i32_35 = arith.constant 0 : i32
      %63 = vector.broadcast %c0_i32_35 : i32 to vector<8x128xi32>
      %64 = arith.cmpi eq, %60, %63 : vector<8x128xi32>
      %65 = arith.andi %62, %64 : vector<8x128xi1>
      %cst_36 = arith.constant 0.000000e+00 : f32
      %66 = vector.broadcast %48 : f32 to vector<8x128xf32>
      %67 = vector.broadcast %cst_36 : f32 to vector<8x128xf32>
      %68 = arith.select %65, %66, %67 : vector<8x128xi1>, vector<8x128xf32>
      %c0_i32_37 = arith.constant 0 : i32
      %69 = vector.broadcast %c0_i32_37 : i32 to vector<8x128xi32>
      %70 = arith.cmpi eq, %59, %69 : vector<8x128xi32>
      %c1_i32 = arith.constant 1 : i32
      %71 = vector.broadcast %c1_i32 : i32 to vector<8x128xi32>
      %72 = arith.cmpi eq, %60, %71 : vector<8x128xi32>
      %73 = arith.andi %70, %72 : vector<8x128xi1>
      %cst_38 = arith.constant 0.000000e+00 : f32
      %74 = vector.broadcast %53 : f32 to vector<8x128xf32>
      %75 = vector.broadcast %cst_38 : f32 to vector<8x128xf32>
      %76 = arith.select %73, %74, %75 : vector<8x128xi1>, vector<8x128xf32>
      %77 = arith.addf %68, %76 : vector<8x128xf32>
      %c0_i32_39 = arith.constant 0 : i32
      %78 = vector.broadcast %c0_i32_39 : i32 to vector<8x128xi32>
      %79 = arith.cmpi eq, %59, %78 : vector<8x128xi32>
      %c2_i32 = arith.constant 2 : i32
      %80 = vector.broadcast %c2_i32 : i32 to vector<8x128xi32>
      %81 = arith.cmpi eq, %60, %80 : vector<8x128xi32>
      %82 = arith.andi %79, %81 : vector<8x128xi1>
      %cst_40 = arith.constant 0.000000e+00 : f32
      %83 = vector.broadcast %58 : f32 to vector<8x128xf32>
      %84 = vector.broadcast %cst_40 : f32 to vector<8x128xf32>
      %85 = arith.select %82, %83, %84 : vector<8x128xi1>, vector<8x128xf32>
      %86 = arith.addf %77, %85 : vector<8x128xf32>
      %c0_41 = arith.constant 0 : index
      %c0_42 = arith.constant 0 : index
      %c0_43 = arith.constant 0 : index
      %c0_44 = arith.constant 0 : index
      %87 = vector.load %arg5[%c0_41, %c0_42, %c0_43, %c0_44] : memref<1x1x8x128xf32, #tpu.memory_space<vmem>>, vector<1x1x8x128xf32>
      %88 = vector.shape_cast %87 : vector<1x1x8x128xf32> to vector<8x128xf32>
      %89 = vector.shape_cast %86 : vector<8x128xf32> to vector<1x1x8x128xf32>
      tpu.vector_store %arg5[%c0_41, %c0_42, %c0_43, %c0_44], %89 {strides = array<i32>} : memref<1x1x8x128xf32, #tpu.memory_space<vmem>>, vector<1x1x8x128xf32>,
    } else {
    }
    return
  }
  func.func @transform_0(%arg0: i32, %arg1: i32, %arg2: i32) -> (i32, i32, i32) {
    %c1_i32 = arith.constant 1 : i32
    %0 = arith.muli %arg1, %c1_i32 : i32
    %1 = arith.addi %0, %arg2 : i32
    %c0_i32 = arith.constant 0 : i32
    %c0_i32_0 = arith.constant 0 : i32
    return %arg0, %c0_i32, %1 : i32, i32, i32
  }
  func.func @transform_1(%arg0: i32, %arg1: i32, %arg2: i32) -> (i32, i32, i32) {
    %c1_i32 = arith.constant 1 : i32
    %0 = arith.muli %arg1, %c1_i32 : i32
    %1 = arith.addi %0, %arg2 : i32
    %c0_i32 = arith.constant 0 : i32
    %c0_i32_0 = arith.constant 0 : i32
    return %arg0, %c0_i32, %1 : i32, i32, i32
  }
  func.func @transform_2(%arg0: i32, %arg1: i32, %arg2: i32) -> (i32, i32, i32, i32) {
    %c0_i32 = arith.constant 0 : i32
    %c0_i32_0 = arith.constant 0 : i32
    %c0_i32_1 = arith.constant 0 : i32
    return %arg0, %arg1, %c0_i32, %c0_i32_0 : i32, i32, i32, i32
  }
}

</mosaic_0001>

<llo_original>
// kernel: dice_ce_loss_2.1
$region0: #{dice_ce_loss_2.1}
  #allocation0 [shape = 'u32[]', space=smem, size = 0x4, offset = 0x4, fixed_abs, tag = 'smem constant byte address 0x4 - core index']
  #allocation1 [shape = 'u32[72,128]{1,0:T(1,128)}', space=vmem, size = 0x9000, scoped, tag = 'internal scratch']
  #allocation2 [shape = 'f32[1,512]{1,0:T(1,128)}', space=vmem, size = 0x800, scoped, tag = 'scratch operand']
  #allocation3 [shape = 'f32[1,512]{1,0:T(1,128)}', space=vmem, size = 0x800, scoped, tag = 'scratch operand']
  #allocation4 [shape = 'f32[1,512]{1,0:T(1,128)}', space=vmem, size = 0x800, scoped, tag = 'scratch operand']
  %s0 = inlined_call_operand.vmem [shape: f32[2,4,512], index: 0, kind: input, shape index: {}]
  %s1 = inlined_call_operand.vmem [shape: bf16[2,4,512], index: 1, kind: input, shape index: {}]
  %s2 = inlined_call_operand.vmem [shape: f32[2,1,8,128], index: 2, kind: output, shape index: {}]
  %s3 = sld [smem:[#allocation0]]
  $region49: #{dice_ce_loss_2.1} parent=0
    _
  %s5 = ssub.s32 1, %s3
  %s6 = scalar_select 0, %s5, %s3
  loop: start=0, step=1, limit=4
  $region2: #{dice_ce_loss_2.1} parent=0 // loop_pre_header
    _
  $region3: #{dice_ce_loss_2.1} parent=0 // loop_header
    %s8 = sphi 0, %s12
    %p9 = scmp.ge.s32.totalorder %s8, 4
    %s15 = sphi 0, %s34
    %s16 = sphi 0, %s30
    %s17 = sphi 0, %s26
    %s18 = sphi 0, %s15
    %s19 = sphi 0, %s16
    %s20 = sphi 0, %s17
    %s21 = sphi 0, %s18
    %s22 = sphi 0, %s19
    %s23 = sphi 0, %s20
    %s41 = sphi 0, %s43
    %s44 = sphi 0, %s41
    %s45 = sphi 0, %s44
    %s61 = sphi 0, %s45
    %s71 = sphi 0, %s73
    %s74 = sphi 0, %s71
    %s75 = sphi 0, %s74
    %s91 = sphi 0, %s75
    %s99 = sphi 0, %s101
    %s102 = sphi 0, %s99
    %s103 = sphi 0, %s102
    %s119 = sphi 0, %s103
  $region4: #{dice_ce_loss_2.1} parent=0 // loop_header_branch
    %11 = sbr.rel (%p9) target = $region8
  $region5: #{dice_ce_loss_2.1} parent=0 // loop_body
    %s13 = ssub.s32 %s8, 1
    %s14 = ssub.s32 %s8, 2
    %s24 = sadd.s32 1, %s17
    %p25 = scmp.ge.s32.totalorder %s24, 1
    %s26 = scalar_select %p25, 0, %s24
    %s27 = sadd.s32 1, %s16
    %s28 = scalar_select %p25, %s27, %s16
    %p29 = scmp.ge.s32.totalorder %s28, 1
    %s30 = scalar_select %p29, 0, %s28
    %s31 = sadd.s32 1, %s15
    %s32 = scalar_select %p29, %s31, %s15
    %p33 = scmp.ge.s32.totalorder %s32, 2
    %s34 = scalar_select %p33, 0, %s32
    %s35 = sadd.s32 %s16, %s17
    %s36 = sadd.s32 %s30, %s26
    %s37 = ssub.s32 %s15, %s34
    %s38 = ssub.s32 %s35, %s36
    %s39 = sor.u32 %s37, %s38
    %p40 = scmp.eq.s32.totalorder %s39, 0
    %s42 = sadd.s32 %s41, 1
    %s43 = scalar_select %p40, %s41, %s42
    %p46 = pneg %p40
    %p47 = scmp.eq.s32.totalorder %s8, 1
    %p48 = por %p46, %p47
    %p49 = scmp.ne.s32.totalorder %s41, %s44
    %p50 = scmp.eq.s32.totalorder %s8, 0
    %p51 = por %p49, %p50
    %p52 = scmp.ne.s32.totalorder %s41, %s44
    %p53 = scmp.eq.s32.totalorder %s13, 1
    %p54 = por %p52, %p53
    %p55 = scmp.ne.s32.totalorder %s44, %s45
    %p56 = scmp.eq.s32.totalorder %s13, 0
    %p57 = por %p55, %p56
    %p58 = scmp.ne.s32.totalorder %s44, %s45
    %p59 = scmp.eq.s32.totalorder %s14, 1
    %p60 = por %p58, %p59
    %p62 = scmp.ne.s32.totalorder %s45, %s61
    %p63 = scmp.eq.s32.totalorder %s14, 0
    %p64 = por %p62, %p63
    %s65 = sadd.s32 %s16, %s17
    %s66 = sadd.s32 %s30, %s26
    %s67 = ssub.s32 %s15, %s34
    %s68 = ssub.s32 %s65, %s66
    %s69 = sor.u32 %s67, %s68
    %p70 = scmp.eq.s32.totalorder %s69, 0
    %s72 = sadd.s32 %s71, 1
    %s73 = scalar_select %p70, %s71, %s72
    %p76 = pneg %p70
    %p77 = scmp.eq.s32.totalorder %s8, 1
    %p78 = por %p76, %p77
    %p79 = scmp.ne.s32.totalorder %s71, %s74
    %p80 = scmp.eq.s32.totalorder %s8, 0
    %p81 = por %p79, %p80
    %p82 = scmp.ne.s32.totalorder %s71, %s74
    %p83 = scmp.eq.s32.totalorder %s13, 1
    %p84 = por %p82, %p83
    %p85 = scmp.ne.s32.totalorder %s74, %s75
    %p86 = scmp.eq.s32.totalorder %s13, 0
    %p87 = por %p85, %p86
    %p88 = scmp.ne.s32.totalorder %s74, %s75
    %p89 = scmp.eq.s32.totalorder %s14, 1
    %p90 = por %p88, %p89
    %p92 = scmp.ne.s32.totalorder %s75, %s91
    %p93 = scmp.eq.s32.totalorder %s14, 0
    %p94 = por %p92, %p93
    %s95 = ssub.s32 %s15, %s34
    %s96 = ssub.s32 %s16, %s30
    %s97 = sor.u32 %s95, %s96
    %p98 = scmp.eq.s32.totalorder %s97, 0
    %s100 = sadd.s32 %s99, 1
    %s101 = scalar_select %p98, %s99, %s100
    %p104 = pneg %p98
    %p105 = scmp.eq.s32.totalorder %s8, 1
    %p106 = por %p104, %p105
    %p107 = scmp.ne.s32.totalorder %s99, %s102
    %p108 = scmp.eq.s32.totalorder %s8, 0
    %p109 = por %p107, %p108
    %p110 = scmp.ne.s32.totalorder %s99, %s102
    %p111 = scmp.eq.s32.totalorder %s13, 1
    %p112 = por %p110, %p111
    %p113 = scmp.ne.s32.totalorder %s102, %s103
    %p114 = scmp.eq.s32.totalorder %s13, 0
    %p115 = por %p113, %p114
    %p116 = scmp.ne.s32.totalorder %s102, %s103
    %p117 = scmp.eq.s32.totalorder %s14, 1
    %p118 = por %p116, %p117
    %p120 = scmp.ne.s32.totalorder %s103, %s119
    %p121 = scmp.eq.s32.totalorder %s14, 0
    %p122 = por %p120, %p121
    %p123 = scmp.le.s32.totalorder 1, %s8
    %p124 = scmp.lt.s32.totalorder %s8, 3
    %p125 = pnand %p123, %p124
    %p126 = pneg %p125
    // Predicated region
    $region9: #{dice_ce_loss_2.1} parent=5 // pred_check
      _
    $region10: #{dice_ce_loss_2.1} parent=5 // pred_check_branch
      %128 = sbr.rel (%p125) target = $region12
    $region11: #{dice_ce_loss_2.1} parent=5 // pred_region
      %s129 = ssub.s32 %s8, 1
    $region12: #{dice_ce_loss_2.1} parent=5 // pred_fallthru
      _
    %p130 = scmp.lt.s32.totalorder %s8, 2
    // Predicated region
    $region13: #{dice_ce_loss_2.1} parent=5 // pred_check
      %p131 = pneg %p130
    $region14: #{dice_ce_loss_2.1} parent=5 // pred_check_branch
      %133 = sbr.rel (%p131) target = $region16
    $region15: #{dice_ce_loss_2.1} parent=5 // pred_region
      // Predicated region
      $region17: #{dice_ce_loss_2.1} parent=15 // pred_check
        %p134 = pneg %p51
      $region18: #{dice_ce_loss_2.1} parent=15 // pred_check_branch
        %136 = sbr.rel (%p134) target = $region20
      $region19: #{dice_ce_loss_2.1} parent=15 // pred_region
        %s137 = sadd.s32 %s16, %s17
        %s138 = smul.u32 4, %s137
        %p139 = scmp.lt.s32.totalorder %s15, 1
        %s140 = scalar_select %p139, %s15, 1
        %p141 = scmp.lt.s32.totalorder %s138, 3
        %s142 = scalar_select %p141, %s138, 3
        %s143 = smul.addr %s140, 4
        %s144 = sadd.s32 %s142, %s143
        %s145 = smul.addr %s144, 4
        %s146 = scalar_lea.vmem %s0, %s145
        %s147 = sadd.s32 %s16, %s17
        %s148 = smul.u32 4, %s147
      $region20: #{dice_ce_loss_2.1} parent=15 // pred_fallthru
        _
      // Predicated region
      $region21: #{dice_ce_loss_2.1} parent=15 // pred_check
        %p149 = pneg %p81
      $region22: #{dice_ce_loss_2.1} parent=15 // pred_check_branch
        %151 = sbr.rel (%p149) target = $region24
      $region23: #{dice_ce_loss_2.1} parent=15 // pred_region
        %s152 = sadd.s32 %s16, %s17
        %s153 = smul.u32 4, %s152
        %p154 = scmp.lt.s32.totalorder %s15, 1
        %s155 = scalar_select %p154, %s15, 1
        %p156 = scmp.lt.s32.totalorder %s153, 3
        %s157 = scalar_select %p156, %s153, 3
        %s158 = smul.addr %s155, 4
        %s159 = sadd.s32 %s157, %s158
        %s160 = smul.addr %s159, 2
        %s161 = scalar_lea.vmem %s1, %s160
        %s162 = sadd.s32 %s16, %s17
        %s163 = smul.u32 4, %s162
      $region24: #{dice_ce_loss_2.1} parent=15 // pred_fallthru
        _
    $region16: #{dice_ce_loss_2.1} parent=5 // pred_fallthru
      _
    %p164 = scmp.le.s32.totalorder 1, %s8
    %p165 = scmp.lt.s32.totalorder %s8, 3
    %p166 = pnand %p164, %p165
    %p167 = pneg %p166
    // Predicated region
    $region25: #{dice_ce_loss_2.1} parent=5 // pred_check
      _
    $region26: #{dice_ce_loss_2.1} parent=5 // pred_check_branch
      %169 = sbr.rel (%p166) target = $region28
    $region27: #{dice_ce_loss_2.1} parent=5 // pred_region
      %s170 = ssub.s32 %s8, 1
      %s171 = sadd.s32 %s19, %s20
      %s172 = smul.u32 4, %s171
      %p173 = scmp.lt.s32.totalorder %s18, 1
      %s174 = scalar_select %p173, %s18, 1
      %p175 = scmp.lt.s32.totalorder %s172, 3
      %s176 = scalar_select %p175, %s172, 3
      %s177 = smul.addr %s174, 4
      %s178 = sadd.s32 %s176, %s177
      %s179 = smul.addr %s178, 4
      %s180 = scalar_lea.vmem %s0, %s179
      %p181 = pneg %p57
      %p182 = pneg %p54
      %s183 = sadd.s32 %s19, %s20
      %s184 = smul.u32 4, %s183
      %p185 = scmp.lt.s32.totalorder %s18, 1
      %s186 = scalar_select %p185, %s18, 1
      %p187 = scmp.lt.s32.totalorder %s184, 3
      %s188 = scalar_select %p187, %s184, 3
      %s189 = smul.addr %s186, 4
      %s190 = sadd.s32 %s188, %s189
      %s191 = smul.addr %s190, 2
      %s192 = scalar_lea.vmem %s1, %s191
      %p193 = pneg %p87
      %p194 = pneg %p84
      %p195 = pneg %p115
      %p196 = pneg %p112
      %p197 = scmp.lt.s32.totalorder %s18, 1
      %s198 = scalar_select %p197, %s18, 1
      %p199 = scmp.lt.s32.totalorder %s19, 0
      %s200 = scalar_select %p199, %s19, 0
      %s201 = sadd.s32 %s200, %s198
      %s202 = smul.addr %s201, 8
      %s203 = scalar_lea.vmem %s2, %s202
      %s204 = sadd.s32 %s19, %s20
      %s205 = smul.u32 4, %s204
      %p206 = scmp.lt.s32.totalorder %s18, 1
      %s207 = scalar_select %p206, %s18, 1
      %p208 = scmp.lt.s32.totalorder %s205, 3
      %s209 = scalar_select %p208, %s205, 3
      %s210 = smul.addr %s207, 4
      %s211 = sadd.s32 %s209, %s210
      %s212 = smul.addr %s211, 4
      %s213 = scalar_lea.vmem %s0, %s212
      %s214 = sadd.s32 %s19, %s20
      %s215 = smul.u32 4, %s214
      %s216 = sadd.s32 %s19, %s20
      %s217 = smul.u32 4, %s216
      %p218 = scmp.lt.s32.totalorder %s18, 1
      %s219 = scalar_select %p218, %s18, 1
      %p220 = scmp.lt.s32.totalorder %s217, 3
      %s221 = scalar_select %p220, %s217, 3
      %s222 = smul.addr %s219, 4
      %s223 = sadd.s32 %s221, %s222
      %s224 = smul.addr %s223, 2
      %s225 = scalar_lea.vmem %s1, %s224
      %s226 = sadd.s32 %s19, %s20
      %s227 = smul.u32 4, %s226
      %p228 = scmp.lt.s32.totalorder %s18, 1
      %s229 = scalar_select %p228, %s18, 1
      %p230 = scmp.lt.s32.totalorder %s19, 0
      %s231 = scalar_select %p230, %s19, 0
      %s232 = sadd.s32 %s231, %s229
      %s233 = smul.addr %s232, 8
      %s234 = scalar_lea.vmem %s2, %s233
      %p235 = scmp.eq.s32.totalorder %s20, 0
      // Predicated region
      $region29: #{dice_ce_loss_2.1} parent=27 // pred_check
        %p236 = pneg %p235
      $region30: #{dice_ce_loss_2.1} parent=27 // pred_check_branch
        %238 = sbr.rel (%p236) target = $region32
      $region31: #{dice_ce_loss_2.1} parent=27 // pred_region
        %v239 = vlaneseq
        %vm240 = vcmp.ge.s32.totalorder %v239, 0
        %vm241 = vcmp.lt.s32.totalorder %v239, 512
        %vm242 = vmand %vm240, %vm241
        %243 = vst.msk [vmem:[#allocation2] sm:$0xf] %vm242, 0.0
        %244 = vst.msk [vmem:[#allocation3] sm:$0xf] %vm242, 0.0
        %245 = vst.msk [vmem:[#allocation4] sm:$0xf] %vm242, 0.0
      $region32: #{dice_ce_loss_2.1} parent=27 // pred_fallthru
        _
      %v246 = vld [vmem:[%s213] sm:$0xff]
      %v247 = vld [vmem:[%s213 + $0x8] sm:$0xff]
      %v248 = vld [vmem:[%s225] sm:$0xff]
      %v249 = vunpack.c.l.bf16 %v248
      %v250 = vunpack.c.h.bf16 %v248
      %253 = vst [vmem:[#allocation1] ss:$2 sm:$0xff] %v246
      %s254 = scalar_lea.vmem [#allocation1], 16
      %255 = vst [vmem:[%s254] ss:$2 sm:$0xff] %v247
      %v256 = vld.sshfl [vmem:[#allocation1] sm:$0xff pattern:$0x75316420]
      %v257 = vld.sshfl [vmem:[#allocation1 + $0x8] sm:$0xff pattern:$0x75316420]
      %v258 = vld.sshfl [vmem:[#allocation1 + $0x10] sm:$0xff pattern:$0x75316420]
      %v259 = vld.sshfl [vmem:[#allocation1 + $0x18] sm:$0xff pattern:$0x75316420]
      %vm264 = vcmask 1043456
      %v265 = vsel %vm264, %v256, -inf
      %v266 = vrot.slane %v265, 4
      %v267 = vmax.f32 %v265, %v266
      %v268 = vrot.slane %v267, 2
      %v269 = vmax.f32 %v267, %v268
      %v270 = vrot.slane %v269, 1
      %v271 = vmax.f32 %v269, %v270
      %v272 = vsel %vm264, %v257, -inf
      %v273 = vrot.slane %v272, 4
      %v274 = vmax.f32 %v272, %v273
      %v275 = vrot.slane %v274, 2
      %v276 = vmax.f32 %v274, %v275
      %v277 = vrot.slane %v276, 1
      %v278 = vmax.f32 %v276, %v277
      %v279 = vsel %vm264, %v258, -inf
      %v280 = vrot.slane %v279, 4
      %v281 = vmax.f32 %v279, %v280
      %v282 = vrot.slane %v281, 2
      %v283 = vmax.f32 %v281, %v282
      %v284 = vrot.slane %v283, 1
      %v285 = vmax.f32 %v283, %v284
      %v286 = vsel %vm264, %v259, -inf
      %v287 = vrot.slane %v286, 4
      %v288 = vmax.f32 %v286, %v287
      %v289 = vrot.slane %v288, 2
      %v290 = vmax.f32 %v288, %v289
      %v291 = vrot.slane %v290, 1
      %v292 = vmax.f32 %v290, %v291
      %v297 = vrot.slane %v278, 4
      %v298 = vrot.slane %v292, 4
      %v299 = vsel %vm264, %v271, %v297
      %v300 = vsel %vm264, %v285, %v298
      %v303 = vsub.f32 %v246, %v299
      %v304 = vsub.f32 %v247, %v300
      %v305 = vmul.f32 %v303, 1.442695
      %v306 = vpow.pop %v305
      %v307 = vmul.f32 %v304, 1.442695
      %v308 = vpow.pop %v307
      %311 = vst [vmem:[#allocation1] ss:$2 sm:$0xff] %v306
      %s312 = scalar_lea.vmem [#allocation1], 16
      %313 = vst [vmem:[%s312] ss:$2 sm:$0xff] %v308
      %v314 = vld.sshfl [vmem:[#allocation1] sm:$0xff pattern:$0x75316420]
      %v315 = vld.sshfl [vmem:[#allocation1 + $0x8] sm:$0xff pattern:$0x75316420]
      %v316 = vld.sshfl [vmem:[#allocation1 + $0x10] sm:$0xff pattern:$0x75316420]
      %v317 = vld.sshfl [vmem:[#allocation1 + $0x18] sm:$0xff pattern:$0x75316420]
      %v322 = vsel %vm264, %v314, 0.0
      %v323 = vrot.slane %v322, 4
      %v324 = vadd.f32 %v322, %v323
      %v325 = vrot.slane %v324, 2
      %v326 = vadd.f32 %v324, %v325
      %v327 = vrot.slane %v326, 1
      %v328 = vadd.f32 %v326, %v327
      %v329 = vsel %vm264, %v315, 0.0
      %v330 = vrot.slane %v329, 4
      %v331 = vadd.f32 %v329, %v330
      %v332 = vrot.slane %v331, 2
      %v333 = vadd.f32 %v331, %v332
      %v334 = vrot.slane %v333, 1
      %v335 = vadd.f32 %v333, %v334
      %v336 = vsel %vm264, %v316, 0.0
      %v337 = vrot.slane %v336, 4
      %v338 = vadd.f32 %v336, %v337
      %v339 = vrot.slane %v338, 2
      %v340 = vadd.f32 %v338, %v339
      %v341 = vrot.slane %v340, 1
      %v342 = vadd.f32 %v340, %v341
      %v343 = vsel %vm264, %v317, 0.0
      %v344 = vrot.slane %v343, 4
      %v345 = vadd.f32 %v343, %v344
      %v346 = vrot.slane %v345, 2
      %v347 = vadd.f32 %v345, %v346
      %v348 = vrot.slane %v347, 1
      %v349 = vadd.f32 %v347, %v348
      %v350 = vrcp.pop %v328
      %v351 = vmul.f32 %v328, %v350
      %v352 = vsub.f32 1.0, %v351
      %v353 = vmul.f32 %v350, %v352
      %v354 = vadd.f32 %v350, %v353
      %vm355 = vweird.f32 %v328
      %vm356 = vweird.f32 %v350
      %vm357 = vmor %vm355, %vm356
      %v358 = vsel %vm357, %v350, %v354
      %v359 = vand.u32 2147483647, %v328
      %vm360 = vcmp.eq.f32.partialorder %v359, 8.507059e+37
      %v361 = vand.u32 %v328, 2147483648
      %v362 = vor.u32 1.1754944e-38, %v361
      %v363 = vsel %vm360, %v362, %v358
      %v364 = vmul.f32 1.0, %v363
      %v365 = vrcp.pop %v335
      %v366 = vmul.f32 %v335, %v365
      %v367 = vsub.f32 1.0, %v366
      %v368 = vmul.f32 %v365, %v367
      %v369 = vadd.f32 %v365, %v368
      %vm370 = vweird.f32 %v335
      %vm371 = vweird.f32 %v365
      %vm372 = vmor %vm370, %vm371
      %v373 = vsel %vm372, %v365, %v369
      %v374 = vand.u32 2147483647, %v335
      %vm375 = vcmp.eq.f32.partialorder %v374, 8.507059e+37
      %v376 = vand.u32 %v335, 2147483648
      %v377 = vor.u32 1.1754944e-38, %v376
      %v378 = vsel %vm375, %v377, %v373
      %v379 = vmul.f32 1.0, %v378
      %v380 = vrcp.pop %v342
      %v381 = vmul.f32 %v342, %v380
      %v382 = vsub.f32 1.0, %v381
      %v383 = vmul.f32 %v380, %v382
      %v384 = vadd.f32 %v380, %v383
      %vm385 = vweird.f32 %v342
      %vm386 = vweird.f32 %v380
      %vm387 = vmor %vm385, %vm386
      %v388 = vsel %vm387, %v380, %v384
      %v389 = vand.u32 2147483647, %v342
      %vm390 = vcmp.eq.f32.partialorder %v389, 8.507059e+37
      %v391 = vand.u32 %v342, 2147483648
      %v392 = vor.u32 1.1754944e-38, %v391
      %v393 = vsel %vm390, %v392, %v388
      %v394 = vmul.f32 1.0, %v393
      %v395 = vrcp.pop %v349
      %v396 = vmul.f32 %v349, %v395
      %v397 = vsub.f32 1.0, %v396
      %v398 = vmul.f32 %v395, %v397
      %v399 = vadd.f32 %v395, %v398
      %vm400 = vweird.f32 %v349
      %vm401 = vweird.f32 %v395
      %vm402 = vmor %vm400, %vm401
      %v403 = vsel %vm402, %v395, %v399
      %v404 = vand.u32 2147483647, %v349
      %vm405 = vcmp.eq.f32.partialorder %v404, 8.507059e+37
      %v406 = vand.u32 %v349, 2147483648
      %v407 = vor.u32 1.1754944e-38, %v406
      %v408 = vsel %vm405, %v407, %v403
      %v409 = vmul.f32 1.0, %v408
      %v410 = vlog2.pop %v328
      %v411 = vmul.f32 %v410, 0.6931472
      %v412 = vlog2.pop %v335
      %v413 = vmul.f32 %v412, 0.6931472
      %v414 = vlog2.pop %v342
      %v415 = vmul.f32 %v414, 0.6931472
      %v416 = vlog2.pop %v349
      %v417 = vmul.f32 %v416, 0.6931472
      %v418 = vadd.f32 %v271, %v411
      %v419 = vadd.f32 %v278, %v413
      %v420 = vadd.f32 %v285, %v415
      %v421 = vadd.f32 %v292, %v417
      %v422 = vld [vmem:[#allocation2] sm:$0xf]
      %v423 = vmul.f32 %v306, %v249
      %v424 = vmul.f32 %v308, %v250
      %427 = vst [vmem:[#allocation1] ss:$2 sm:$0xff] %v423
      %s428 = scalar_lea.vmem [#allocation1], 16
      %429 = vst [vmem:[%s428] ss:$2 sm:$0xff] %v424
      %v430 = vld.sshfl [vmem:[#allocation1] sm:$0xff pattern:$0x75316420]
      %v431 = vld.sshfl [vmem:[#allocation1 + $0x8] sm:$0xff pattern:$0x75316420]
      %v432 = vld.sshfl [vmem:[#allocation1 + $0x10] sm:$0xff pattern:$0x75316420]
      %v433 = vld.sshfl [vmem:[#allocation1 + $0x18] sm:$0xff pattern:$0x75316420]
      %v438 = vsel %vm264, %v430, 0.0
      %v439 = vrot.slane %v438, 4
      %v440 = vadd.f32 %v438, %v439
      %v441 = vrot.slane %v440, 2
      %v442 = vadd.f32 %v440, %v441
      %v443 = vrot.slane %v442, 1
      %v444 = vadd.f32 %v442, %v443
      %v445 = vsel %vm264, %v431, 0.0
      %v446 = vrot.slane %v445, 4
      %v447 = vadd.f32 %v445, %v446
      %v448 = vrot.slane %v447, 2
      %v449 = vadd.f32 %v447, %v448
      %v450 = vrot.slane %v449, 1
      %v451 = vadd.f32 %v449, %v450
      %v452 = vsel %vm264, %v432, 0.0
      %v453 = vrot.slane %v452, 4
      %v454 = vadd.f32 %v452, %v453
      %v455 = vrot.slane %v454, 2
      %v456 = vadd.f32 %v454, %v455
      %v457 = vrot.slane %v456, 1
      %v458 = vadd.f32 %v456, %v457
      %v459 = vsel %vm264, %v433, 0.0
      %v460 = vrot.slane %v459, 4
      %v461 = vadd.f32 %v459, %v460
      %v462 = vrot.slane %v461, 2
      %v463 = vadd.f32 %v461, %v462
      %v464 = vrot.slane %v463, 1
      %v465 = vadd.f32 %v463, %v464
      %v466 = vmul.f32 %v364, %v444
      %v467 = vmul.f32 %v379, %v451
      %v468 = vmul.f32 %v394, %v458
      %v469 = vmul.f32 %v409, %v465
      %v474 = vrot.slane %v467, 7
      %v475 = vrot.slane %v468, 6
      %v476 = vrot.slane %v469, 5
      %vm477 = vcmask 1040384
      %v478 = vsel %vm477, %v466, %v474
      %vm479 = vcmask 1042434
      %v480 = vsel %vm479, %v475, %v476
      %vm481 = vcmask 1041408
      %v482 = vsel %vm481, %v478, %v480
      %v484 = vadd.f32 %v422, %v482
      %v485 = vlaneseq
      %vm486 = vcmp.ge.s32.totalorder %v485, 0
      %vm487 = vcmp.lt.s32.totalorder %v485, 512
      %vm488 = vmand %vm486, %vm487
      %489 = vst.msk [vmem:[#allocation2] sm:$0xf] %vm488, %v484
      %v490 = vld [vmem:[#allocation3] sm:$0xf]
      %v491 = vmul.f32 %v364, %v364
      %v492 = vmul.f32 %v379, %v379
      %v493 = vmul.f32 %v394, %v394
      %v494 = vmul.f32 %v409, %v409
      %v495 = vmul.f32 %v306, %v306
      %v496 = vmul.f32 %v308, %v308
      %499 = vst [vmem:[#allocation1] ss:$2 sm:$0xff] %v495
      %s500 = scalar_lea.vmem [#allocation1], 16
      %501 = vst [vmem:[%s500] ss:$2 sm:$0xff] %v496
      %v502 = vld.sshfl [vmem:[#allocation1] sm:$0xff pattern:$0x75316420]
      %v503 = vld.sshfl [vmem:[#allocation1 + $0x8] sm:$0xff pattern:$0x75316420]
      %v504 = vld.sshfl [vmem:[#allocation1 + $0x10] sm:$0xff pattern:$0x75316420]
      %v505 = vld.sshfl [vmem:[#allocation1 + $0x18] sm:$0xff pattern:$0x75316420]
      %v510 = vsel %vm264, %v502, 0.0
      %v511 = vrot.slane %v510, 4
      %v512 = vadd.f32 %v510, %v511
      %v513 = vrot.slane %v512, 2
      %v514 = vadd.f32 %v512, %v513
      %v515 = vrot.slane %v514, 1
      %v516 = vadd.f32 %v514, %v515
      %v517 = vsel %vm264, %v503, 0.0
      %v518 = vrot.slane %v517, 4
      %v519 = vadd.f32 %v517, %v518
      %v520 = vrot.slane %v519, 2
      %v521 = vadd.f32 %v519, %v520
      %v522 = vrot.slane %v521, 1
      %v523 = vadd.f32 %v521, %v522
      %v524 = vsel %vm264, %v504, 0.0
      %v525 = vrot.slane %v524, 4
      %v526 = vadd.f32 %v524, %v525
      %v527 = vrot.slane %v526, 2
      %v528 = vadd.f32 %v526, %v527
      %v529 = vrot.slane %v528, 1
      %v530 = vadd.f32 %v528, %v529
      %v531 = vsel %vm264, %v505, 0.0
      %v532 = vrot.slane %v531, 4
      %v533 = vadd.f32 %v531, %v532
      %v534 = vrot.slane %v533, 2
      %v535 = vadd.f32 %v533, %v534
      %v536 = vrot.slane %v535, 1
      %v537 = vadd.f32 %v535, %v536
      %v538 = vmul.f32 %v491, %v516
      %v539 = vmul.f32 %v492, %v523
      %v540 = vmul.f32 %v493, %v530
      %v541 = vmul.f32 %v494, %v537
      %v546 = vrot.slane %v539, 7
      %v547 = vrot.slane %v540, 6
      %v548 = vrot.slane %v541, 5
      %v549 = vsel %vm477, %v538, %v546
      %v550 = vsel %vm479, %v547, %v548
      %v551 = vsel %vm481, %v549, %v550
      %v553 = vadd.f32 %v490, %v551
      %554 = vst.msk [vmem:[#allocation3] sm:$0xf] %vm488, %v553
      %v555 = vmul.f32 %v246, %v249
      %v556 = vmul.f32 %v247, %v250
      %559 = vst [vmem:[#allocation1] ss:$2 sm:$0xff] %v555
      %s560 = scalar_lea.vmem [#allocation1], 16
      %561 = vst [vmem:[%s560] ss:$2 sm:$0xff] %v556
      %v562 = vld.sshfl [vmem:[#allocation1] sm:$0xff pattern:$0x75316420]
      %v563 = vld.sshfl [vmem:[#allocation1 + $0x8] sm:$0xff pattern:$0x75316420]
      %v564 = vld.sshfl [vmem:[#allocation1 + $0x10] sm:$0xff pattern:$0x75316420]
      %v565 = vld.sshfl [vmem:[#allocation1 + $0x18] sm:$0xff pattern:$0x75316420]
      %v570 = vsel %vm264, %v562, 0.0
      %v571 = vrot.slane %v570, 4
      %v572 = vadd.f32 %v570, %v571
      %v573 = vrot.slane %v572, 2
      %v574 = vadd.f32 %v572, %v573
      %v575 = vrot.slane %v574, 1
      %v576 = vadd.f32 %v574, %v575
      %v577 = vsel %vm264, %v563, 0.0
      %v578 = vrot.slane %v577, 4
      %v579 = vadd.f32 %v577, %v578
      %v580 = vrot.slane %v579, 2
      %v581 = vadd.f32 %v579, %v580
      %v582 = vrot.slane %v581, 1
      %v583 = vadd.f32 %v581, %v582
      %v584 = vsel %vm264, %v564, 0.0
      %v585 = vrot.slane %v584, 4
      %v586 = vadd.f32 %v584, %v585
      %v587 = vrot.slane %v586, 2
      %v588 = vadd.f32 %v586, %v587
      %v589 = vrot.slane %v588, 1
      %v590 = vadd.f32 %v588, %v589
      %v591 = vsel %vm264, %v565, 0.0
      %v592 = vrot.slane %v591, 4
      %v593 = vadd.f32 %v591, %v592
      %v594 = vrot.slane %v593, 2
      %v595 = vadd.f32 %v593, %v594
      %v596 = vrot.slane %v595, 1
      %v597 = vadd.f32 %v595, %v596
      %v598 = vld [vmem:[#allocation4] sm:$0xf]
      %v599 = vsub.f32 %v418, %v576
      %v600 = vsub.f32 %v419, %v583
      %v601 = vsub.f32 %v420, %v590
      %v602 = vsub.f32 %v421, %v597
      %v607 = vrot.slane %v600, 7
      %v608 = vrot.slane %v601, 6
      %v609 = vrot.slane %v602, 5
      %v610 = vsel %vm477, %v599, %v607
      %v611 = vsel %vm479, %v608, %v609
      %v612 = vsel %vm481, %v610, %v611
      %v614 = vadd.f32 %v598, %v612
      %615 = vst.msk [vmem:[#allocation4] sm:$0xf] %vm488, %v614
      // Predicated region
      $region33: #{dice_ce_loss_2.1} parent=27 // pred_check
        %p616 = pneg %p235
      $region34: #{dice_ce_loss_2.1} parent=27 // pred_check_branch
        %618 = sbr.rel (%p616) target = $region36
      $region35: #{dice_ce_loss_2.1} parent=27 // pred_region
        %v619 = vld [vmem:[#allocation2] sm:$0xf]
        %v621 = vperm.slane %v619, 0
        %v622 = vperm.slane %v619, 1
        %v623 = vperm.slane %v619, 2
        %v624 = vperm.slane %v619, 3
        %v629 = vsel %vm477, %v621, 0.0
        %v630 = vsel %vm477, %v622, 0.0
        %v631 = vadd.f32 %v629, %v630
        %v632 = vsel %vm477, %v623, 0.0
        %v633 = vadd.f32 %v631, %v632
        %v634 = vsel %vm477, %v624, 0.0
        %v635 = vadd.f32 %v633, %v634
        %636 = vadd.xlane.f32.xlu0 %v635
        %v637 = vpop.xlane.xlu0 %636
        %v638 = vrot.slane %v637, 4
        %v639 = vadd.f32 %v637, %v638
        %v640 = vrot.slane %v639, 2
        %v641 = vadd.f32 %v639, %v640
        %v642 = vrot.slane %v641, 1
        %v643 = vadd.f32 %v641, %v642
        %s644 = vtos %v643
        %v645 = vld [vmem:[#allocation3] sm:$0xf]
        %v647 = vperm.slane %v645, 0
        %v648 = vperm.slane %v645, 1
        %v649 = vperm.slane %v645, 2
        %v650 = vperm.slane %v645, 3
        %v655 = vsel %vm477, %v647, 0.0
        %v656 = vsel %vm477, %v648, 0.0
        %v657 = vadd.f32 %v655, %v656
        %v658 = vsel %vm477, %v649, 0.0
        %v659 = vadd.f32 %v657, %v658
        %v660 = vsel %vm477, %v650, 0.0
        %v661 = vadd.f32 %v659, %v660
        %662 = vadd.xlane.f32.xlu0 %v661
        %v663 = vpop.xlane.xlu0 %662
        %v664 = vrot.slane %v663, 4
        %v665 = vadd.f32 %v663, %v664
        %v666 = vrot.slane %v665, 2
        %v667 = vadd.f32 %v665, %v666
        %v668 = vrot.slane %v667, 1
        %v669 = vadd.f32 %v667, %v668
        %s670 = vtos %v669
        %v671 = vld [vmem:[#allocation4] sm:$0xf]
        %v673 = vperm.slane %v671, 0
        %v674 = vperm.slane %v671, 1
        %v675 = vperm.slane %v671, 2
        %v676 = vperm.slane %v671, 3
        %v681 = vsel %vm477, %v673, 0.0
        %v682 = vsel %vm477, %v674, 0.0
        %v683 = vadd.f32 %v681, %v682
        %v684 = vsel %vm477, %v675, 0.0
        %v685 = vadd.f32 %v683, %v684
        %v686 = vsel %vm477, %v676, 0.0
        %v687 = vadd.f32 %v685, %v686
        %688 = vadd.xlane.f32.xlu0 %v687
        %v689 = vpop.xlane.xlu0 %688
        %v690 = vrot.slane %v689, 4
        %v691 = vadd.f32 %v689, %v690
        %v692 = vrot.slane %v691, 2
        %v693 = vadd.f32 %v691, %v692
        %v694 = vrot.slane %v693, 1
        %v695 = vadd.f32 %v693, %v694
        %s696 = vtos %v695
        %v697 = vlaneseq
        %v698 = vshrl.u32 %v697, 7
        %v699 = vlaneseq
        %v700 = vand.u32 %v699, 127
        %vm701 = vcmp.eq.s32.totalorder %v698, 0
        %vm702 = vcmp.eq.s32.totalorder %v700, 0
        %vm703 = vmand %vm701, %vm702
        %v704 = vstv %s644
        %v705 = vsel %vm703, %v704, 0.0
        %vm706 = vcmp.eq.s32.totalorder %v700, 1
        %vm707 = vmand %vm701, %vm706
        %v708 = vstv %s670
        %v709 = vsel %vm707, %v708, 0.0
        %v710 = vadd.f32 %v705, %v709
        %vm711 = vcmp.eq.s32.totalorder %v700, 2
        %vm712 = vmand %vm701, %vm711
        %v713 = vstv %s696
        %v714 = vsel %vm712, %v713, 0.0
        %v715 = vadd.f32 %v710, %v714
        %716 = vst [vmem:[%s234] sm:$0xff] %v715
      $region36: #{dice_ce_loss_2.1} parent=27 // pred_fallthru
        _
      %p717 = scmp.lt.s32.totalorder %s18, 1
      %s718 = scalar_select %p717, %s18, 1
      %p719 = scmp.lt.s32.totalorder %s19, 0
      %s720 = scalar_select %p719, %s19, 0
      %s721 = sadd.s32 %s720, %s718
      %s722 = smul.addr %s721, 8
      %s723 = scalar_lea.vmem %s2, %s722
      // Predicated region
      $region37: #{dice_ce_loss_2.1} parent=27 // pred_check
        %p724 = pneg %p112
      $region38: #{dice_ce_loss_2.1} parent=27 // pred_check_branch
        %726 = sbr.rel (%p724) target = $region40
      $region39: #{dice_ce_loss_2.1} parent=27 // pred_region
        _
      $region40: #{dice_ce_loss_2.1} parent=27 // pred_fallthru
        _
    $region28: #{dice_ce_loss_2.1} parent=5 // pred_fallthru
      _
    %p727 = scmp.le.s32.totalorder 2, %s8
    // Predicated region
    $region41: #{dice_ce_loss_2.1} parent=5 // pred_check
      %p728 = pneg %p727
    $region42: #{dice_ce_loss_2.1} parent=5 // pred_check_branch
      %730 = sbr.rel (%p728) target = $region44
    $region43: #{dice_ce_loss_2.1} parent=5 // pred_region
      %s731 = ssub.s32 %s8, 2
      // Predicated region
      $region45: #{dice_ce_loss_2.1} parent=43 // pred_check
        %p732 = pneg %p118
      $region46: #{dice_ce_loss_2.1} parent=43 // pred_check_branch
        %734 = sbr.rel (%p732) target = $region48
      $region47: #{dice_ce_loss_2.1} parent=43 // pred_region
        %p735 = scmp.lt.s32.totalorder %s21, 1
        %s736 = scalar_select %p735, %s21, 1
        %p737 = scmp.lt.s32.totalorder %s22, 0
        %s738 = scalar_select %p737, %s22, 0
        %s739 = sadd.s32 %s738, %s736
        %s740 = smul.addr %s739, 8
        %s741 = scalar_lea.vmem %s2, %s740
      $region48: #{dice_ce_loss_2.1} parent=43 // pred_fallthru
        _
    $region44: #{dice_ce_loss_2.1} parent=5 // pred_fallthru
      _
  $region6: #{dice_ce_loss_2.1} parent=0 // loop_footer
    %s12 = sadd.s32 1, %s8
  $region7: #{dice_ce_loss_2.1} parent=0 // loop_footer_branch
    %7 = sbr.rel target = $region3
  $region8: #{dice_ce_loss_2.1} parent=0 // loop_exit
    _

</llo_original>
